<compile_context>
chip_gen: v5e
topology: v5e:2x2
jax: 0.10.0
libtpu: 0.0.40
codegen_flags: <defaults>
</compile_context>

<pallas_src>
import functools
import math

import numpy as np
import jax
import jax.numpy as jnp
from jax.experimental import pallas as pl
from jax.experimental.pallas import tpu as pltpu


_HALF_PI = np.float32(0.5 * np.pi)


def _make_frequencies(n_harmonic_functions, omega_0, logspace):
    if logspace:
        freqs = 2.0 ** np.arange(n_harmonic_functions, dtype=np.float32)
    else:
        freqs = np.linspace(1.0, 2.0 ** (n_harmonic_functions - 1),
                            n_harmonic_functions, dtype=np.float32)
    return (freqs * np.float32(omega_0)).astype(np.float32)


def get_output_dim(input_dims, n_harmonic_functions, append_input=True):
    return input_dims * (2 * n_harmonic_functions + int(append_input))


def harmonic_embedding_reference(x, diag_cov=None, *, frequencies, append_input=True):
    """Pure-JAX mirror of the PyTorch HarmonicEmbedding.forward."""
    x = jnp.asarray(x, jnp.float32)
    freqs = jnp.asarray(frequencies, jnp.float32)
    zero_half_pi = jnp.array([0.0, 0.5 * np.pi], jnp.float32)
    embed = x[..., None] * freqs                                     # [..., D, N]
    embed = embed[..., None, :, :] + zero_half_pi[..., None, None]   # [..., 2, D, N]
    embed = jnp.sin(embed)
    if diag_cov is not None:
        x_var = jnp.asarray(diag_cov, jnp.float32)[..., None] * freqs ** 2
        embed = embed * jnp.exp(-0.5 * x_var)[..., None, :, :]
    embed = embed.reshape(*x.shape[:-1], -1)
    if append_input:
        return jnp.concatenate([embed, x], axis=-1)
    return embed


# --------------------------------------------------------------------------
# Folded (lane-dense) kernels: rows folded into lanes, MXU does the routing.
# --------------------------------------------------------------------------
def _build_folded_constants(freqs, d, k, append_input):
    """Block-diagonal routing matrices for the folded layout.

    W  routes x into every sin/cos lane (weight f_t) and into the passthrough
       lane (weight 1.0).
    W2 routes diag_cov with weight -0.5*f_t^2 (MIP-NeRF damping); 0 elsewhere.
    bias adds +pi/2 on the cos lanes (torch computes cos as sin(x + pi/2)).
    mask is 1.0 on the passthrough lanes.
    """
    n = int(freqs.shape[0])
    e = d * (2 * n + int(append_input))
    din, eout = k * d, k * e
    w = np.zeros((din, eout), np.float32)
    w2 = np.zeros((din, eout), np.float32)
    bias = np.zeros((1, eout), np.float32)
    mask = np.zeros((1, eout), np.float32)
    for m in range(k):
        base = m * e
        for j in range(d):
            row = m * d + j
            s0 = base + j * n              # sin slots for channel j
            c0 = base + d * n + j * n      # cos slots for channel j
            w[row, s0:s0 + n] = freqs
            w[row, c0:c0 + n] = freqs
            w2[row, s0:s0 + n] = -0.5 * freqs ** 2
            w2[row, c0:c0 + n] = -0.5 * freqs ** 2
            bias[0, c0:c0 + n] = 0.5 * np.pi
            if append_input:
                p = base + 2 * d * n + j
                w[row, p] = 1.0
                mask[0, p] = 1.0
    return w, w2, bias, mask


def _folded_kernel(x_ref, w_ref, bias_ref, mask_ref, out_ref):
    # One MXU matmul expands x into every sin/cos/passthrough lane with the
    # per-lane frequency already applied; the bias adds pi/2 on the cos lanes.
    phase = jnp.dot(x_ref[...], w_ref[...],
                    preferred_element_type=jnp.float32,
                    precision=jax.lax.Precision.HIGHEST)
    phase = phase + bias_ref[...]
    keep = jnp.broadcast_to(mask_ref[...], phase.shape) > 0.5
    out_ref[...] = jnp.where(keep, phase, jnp.sin(phase)).astype(out_ref.dtype)


def _folded_kernel_cov(x_ref, cov_ref, w_ref, w2_ref, bias_ref, mask_ref, out_ref):
    phase = jnp.dot(x_ref[...], w_ref[...],
                    preferred_element_type=jnp.float32,
                    precision=jax.lax.Precision.HIGHEST) + bias_ref[...]
    # exp(-0.5*f^2*cov) on sin/cos lanes; passthrough columns of W2 are zero so
    # damp == 1 there (and those lanes are overridden by `keep` anyway).  In a
    # ragged tail block the padded cov rows may produce inf/NaN, but those rows
    # are clipped on writeback and cannot contaminate valid output.
    damp = jnp.exp(jnp.dot(cov_ref[...], w2_ref[...],
                           preferred_element_type=jnp.float32,
                           precision=jax.lax.Precision.HIGHEST))
    keep = jnp.broadcast_to(mask_ref[...], phase.shape) > 0.5
    out_ref[...] = jnp.where(keep, phase, jnp.sin(phase) * damp).astype(out_ref.dtype)


# --------------------------------------------------------------------------
# Row-wise fallback kernels (rows on sublanes) for shapes that do not fold.
# --------------------------------------------------------------------------
def _expand_cols(x, n):
    """jnp.repeat(x, n, axis=-1) (d-major, n-fast) via lane-broadcast + concat."""
    rows, d = x.shape
    return jnp.concatenate(
        [jnp.broadcast_to(x[:, j:j + 1], (rows, n)) for j in range(d)], axis=-1)


def _rowwise_kernel(x_ref, freq_ref, out_ref, *, n, append_input):
    x = x_ref[...]
    phase = _expand_cols(x, n) * freq_ref[...]
    # sin(phase + pi/2) (not jnp.cos) to stay bit-compatible with torch's
    # formulation for large phases.
    parts = [jnp.sin(phase), jnp.sin(phase + _HALF_PI)]
    if append_input:
        parts.append(x)
    out_ref[...] = jnp.concatenate(parts, axis=-1).astype(out_ref.dtype)


def _rowwise_kernel_cov(x_ref, cov_ref, freq_ref, out_ref, *, n, append_input):
    x = x_ref[...]
    f = freq_ref[...]
    phase = _expand_cols(x, n) * f
    damp = jnp.exp(_expand_cols(cov_ref[...], n) * (f * f) * np.float32(-0.5))
    parts = [jnp.sin(phase) * damp, jnp.sin(phase + _HALF_PI) * damp]
    if append_input:
        parts.append(x)
    out_ref[...] = jnp.concatenate(parts, axis=-1).astype(out_ref.dtype)


# --------------------------------------------------------------------------
# Tiling helpers.
# --------------------------------------------------------------------------
def _vmem_capacity_bytes():
    try:
        info = pltpu.get_tpu_info()
        cap = int(getattr(info, "vmem_capacity_bytes", 0))
        if cap > 0:
            return cap
    except Exception:
        pass
    return 64 * 1024 * 1024      # conservative default: v7x has 64 MiB / TensorCore


def _round_up(v, m):
    return -(-int(v) // int(m)) * int(m)


def _pick_row_tile(n_rows, requested, vmem_budget, vmem_row_bytes, hbm_row_bytes,
                   target_steps=8, min_step_bytes=(2 << 20)):
    """Rows per grid step: a multiple of 8, or the full row count."""
    vmem_cap_rows = max(8, (vmem_budget // max(1, 2 * vmem_row_bytes)) // 8 * 8)
    tr = max(8, (int(requested) // 8) * 8)
    tr = min(tr, vmem_cap_rows)
    # Prefer >= target_steps grid steps (pipeline ramp + v7x megacore row split)
    # as long as each step still moves >= min_step_bytes of HBM traffic so the
    # ~0.35us fixed per-step cost stays amortized.
    floor_rows = _round_up(max(8, min_step_bytes // max(1, hbm_row_bytes)), 8)
    tr = min(tr, max(floor_rows, (n_rows // target_steps) // 8 * 8))
    if n_rows <= tr:
        tr = n_rows                # single block == full array dims (always legal)
    return max(1, tr)


# --------------------------------------------------------------------------
# Public entry point.
# --------------------------------------------------------------------------
def harmonic_embedding(x, diag_cov=None, *, n_harmonic_functions=6, omega_0=1.0,
                       logspace=True, append_input=True, row_tile=8192,
                       out_dtype=jnp.float32, min_elements_for_kernel=(1 << 16)):
    """Pallas-TPU equivalent of HarmonicEmbedding.forward."""
    x = jnp.asarray(x, jnp.float32)
    orig_shape = x.shape
    d = int(orig_shape[-1])
    r = int(np.prod(orig_shape[:-1])) if len(orig_shape) > 1 else 1
    n = int(n_harmonic_functions)
    e = d * (2 * n + int(append_input))
    has_cov = diag_cov is not None
    out_dtype = np.dtype(out_dtype)

    freqs = _make_frequencies(n, omega_0, logspace)

    # Tiny problems: pallas_call launch + per-step overhead dwarfs the work.
    if r * d < min_elements_for_kernel:
        out = harmonic_embedding_reference(x, diag_cov, frequencies=freqs,
                                           append_input=append_input)
        return out.astype(out_dtype)

    x2 = x.reshape(r, d)
    cov2 = jnp.asarray(diag_cov, jnp.float32).reshape(r, d) if has_cov else None

    # Generation-aware VMEM budget for double-buffered blocks + resident
    # constants (v7x: 64 MiB/TC physical; v5e/v6e: 128 MiB).
    vmem_cap = _vmem_capacity_bytes()
    block_budget = min(int(0.45 * vmem_cap), 48 << 20)
    vmem_limit = int(min(max(block_budget + (32 << 20), 64 << 20), vmem_cap, 128 << 20))
    compiler_params = pltpu.CompilerParams(
        dimension_semantics=("parallel",),       # rows independent -> megacore split
        vmem_limit_bytes=vmem_limit)

    out_isize = int(out_dtype.itemsize)
    cost = pl.CostEstimate(
        flops=int(2 * r * d * e * (2 if has_cov else 1)),
        transcendentals=int(r * d * n * 2 * (2 if has_cov else 1)),
        bytes_accessed=int(4 * r * d * (2 if has_cov else 1) + out_isize * r * e))

    # Lane-dense folded fast path: fold k rows into the lane axis so the output
    # block width k*E is a multiple of 128 (full-width vst) and the input block
    # fills whole vregs.  Requires R % k == 0 (pure reshape, no padding copy).
    k = 128 // math.gcd(e, 128)
    w_bytes = 4 * (k * d) * (k * e)
    const_bytes = 2 * ((2 if has_cov else 1) * w_bytes + 2 * 4 * (k * e))
    use_folded = (r % k == 0) and (r // k >= 8) and (const_bytes <= block_budget // 3)

    def _rowwise_call():
        # Rows stay on sublanes; lane widths are D (in) / E (out), so VMEM pads
        # them up to the next multiple of 128 -- accounted for in vmem_row.
        freq_row = jnp.asarray(np.tile(freqs, d).reshape(1, d * n))
        vmem_row = 4 * _round_up(d, 128) * (2 if has_cov else 1) \
            + out_isize * _round_up(e, 128)
        hbm_row = 4 * d * (2 if has_cov else 1) + out_isize * e
        tr = _pick_row_tile(r, row_tile, block_budget, vmem_row, hbm_row)
        grid = (pl.cdiv(r, tr),)         # ragged tail block is masked by Pallas
        if has_cov:
            kernel = functools.partial(_rowwise_kernel_cov, n=n, append_input=append_input)
            args = [x2, cov2]
            in_specs = [pl.BlockSpec((tr, d), lambda i: (i, 0)),
                        pl.BlockSpec((tr, d), lambda i: (i, 0))]
        else:
            kernel = functools.partial(_rowwise_kernel, n=n, append_input=append_input)
            args = [x2]
            in_specs = [pl.BlockSpec((tr, d), lambda i: (i, 0))]
        # Constant-index block: its block index never changes, so the pipeline
        # fetches it once instead of re-DMAing it every step.
        args.append(freq_row)
        in_specs.append(pl.BlockSpec((1, d * n), lambda i: (0, 0)))
        return pl.pallas_call(
            kernel,
            out_shape=jax.ShapeDtypeStruct((r, e), out_dtype),
            grid=grid,
            in_specs=in_specs,
            out_specs=pl.BlockSpec((tr, e), lambda i: (i, 0)),
            compiler_params=compiler_params,
            cost_estimate=cost,
        )(*args)

    def _folded_call():
        rf = r // k
        din, eout = k * d, k * e
        w, w2, bias, mask = _build_folded_constants(freqs, d, k, append_input)
        vmem_row = (4 * _round_up(din, 128)) * (2 if has_cov else 1) + out_isize * eout
        hbm_row = 4 * din * (2 if has_cov else 1) + out_isize * eout
        tr = _pick_row_tile(rf, max(1, int(row_tile) // k),
                            block_budget - const_bytes, vmem_row, hbm_row)
        grid = (pl.cdiv(rf, tr),)
        args = [x2.reshape(rf, din)]
        in_specs = [pl.BlockSpec((tr, din), lambda i: (i, 0))]
        if has_cov:
            args.append(cov2.reshape(rf, din))
            in_specs.append(pl.BlockSpec((tr, din), lambda i: (i, 0)))
            kernel = _folded_kernel_cov
        else:
            kernel = _folded_kernel
        # Constant operands (fetched once; block index never changes).
        args.append(jnp.asarray(w))
        in_specs.append(pl.BlockSpec((din, eout), lambda i: (0, 0)))
        if has_cov:
            args.append(jnp.asarray(w2))
            in_specs.append(pl.BlockSpec((din, eout), lambda i: (0, 0)))
        args.append(jnp.asarray(bias))
        in_specs.append(pl.BlockSpec((1, eout), lambda i: (0, 0)))
        args.append(jnp.asarray(mask))
        in_specs.append(pl.BlockSpec((1, eout), lambda i: (0, 0)))
        out = pl.pallas_call(
            kernel,
            out_shape=jax.ShapeDtypeStruct((rf, eout), out_dtype),
            grid=grid,
            in_specs=in_specs,
            out_specs=pl.BlockSpec((tr, eout), lambda i: (i, 0)),
            compiler_params=compiler_params,
            cost_estimate=cost,
        )(*args)
        return out.reshape(r, e)

    if use_folded:
        try:
            out2d = _folded_call()
        except Exception:
            # Defensive: if this jax/Mosaic build rejects anything in the folded
            # MXU path (e.g. the HIGHEST-precision f32 matmul), keep running on
            # the proven row-wise kernel instead of failing.
            out2d = _rowwise_call()
    else:
        out2d = _rowwise_call()

    # TODO(synk): expose a pre-packed bf16 weight variant if consumers want an
    # even cheaper half-precision embedding on v5e.
    return out2d.reshape(*orig_shape[:-1], e)


if __name__ == "__main__":
    key = jax.random.PRNGKey(0)
    k1, k2, k3, k4, k5 = jax.random.split(key, 5)

    freqs10 = _make_frequencies(10, 1.0, True)
    freqs6 = _make_frequencies(6, 1.0, True)

    # 1) Small PoseEmbedding config (n=10, D=8): R=16 rows -> row-wise path.
    pose = jax.random.normal(k1, (2, 8, 8), dtype=jnp.float32)
    out = jax.block_until_ready(
        harmonic_embedding(pose, n_harmonic_functions=10, min_elements_for_kernel=0))
    assert out.shape == (2, 8, get_output_dim(8, 10, True)), out.shape
    ref = harmonic_embedding_reference(pose, frequencies=freqs10, append_input=True)
    np.testing.assert_allclose(np.asarray(out), np.asarray(ref), atol=2e-5, rtol=2e-5)

    # 1b) MIP-NeRF damping on the row-wise path.
    cov_s = jax.nn.softplus(jax.random.normal(k2, (2, 8, 8), dtype=jnp.float32))
    out_cs = jax.block_until_ready(
        harmonic_embedding(pose, cov_s, n_harmonic_functions=10, min_elements_for_kernel=0))
    ref_cs = harmonic_embedding_reference(pose, cov_s, frequencies=freqs10, append_input=True)
    np.testing.assert_allclose(np.asarray(out_cs), np.asarray(ref_cs), atol=2e-5, rtol=2e-5)

    # 2) Module defaults (n=6) + ragged row count: R=15 rows with row_tile=8
    #    -> 2 grid steps, masked tail block.
    x_r = jax.random.normal(k3, (3, 5, 8), dtype=jnp.float32)
    out_r = jax.block_until_ready(
        harmonic_embedding(x_r, n_harmonic_functions=6, row_tile=8,
                           min_elements_for_kernel=0))
    assert out_r.shape == (3, 5, get_output_dim(8, 6, True)), out_r.shape
    ref_r = harmonic_embedding_reference(x_r, frequencies=freqs6, append_input=True)
    np.testing.assert_allclose(np.asarray(out_r), np.asarray(ref_r), atol=2e-5, rtol=2e-5)

    # 3) Folded lane-dense / MXU path: R = 4*2048 = 8192 rows (divisible by k=16).
    x_b = jax.random.uniform(k4, (4, 2048, 8), jnp.float32, minval=-1.0, maxval=1.0)
    out_b = jax.block_until_ready(
        harmonic_embedding(x_b, n_harmonic_functions=10, min_elements_for_kernel=0))
    assert out_b.shape == (4, 2048, get_output_dim(8, 10, True)), out_b.shape
    ref_b = harmonic_embedding_reference(x_b, frequencies=freqs10, append_input=True)
    np.testing.assert_allclose(np.asarray(out_b), np.asarray(ref_b), atol=1e-4, rtol=1e-4)

    # 4) MIP-NeRF (diag_cov) on the folded path.
    cov_b = jax.nn.softplus(jax.random.normal(k5, (4, 2048, 8), dtype=jnp.float32))
    out_cb = jax.block_until_ready(
        harmonic_embedding(x_b, cov_b, n_harmonic_functions=10, min_elements_for_kernel=0))
    ref_cb = harmonic_embedding_reference(x_b, cov_b, frequencies=freqs10, append_input=True)
    np.testing.assert_allclose(np.asarray(out_cb), np.asarray(ref_cb), atol=1e-4, rtol=1e-4)

    print("KERNEL_OK")
</pallas_src>

<mosaic_0001>
module attributes {stable_mosaic.version = 11 : i64} {
  func.func @_rowwise_kernel(%arg0: i32, %arg1: memref<16x8xf32, #tpu.memory_space<vmem>>, %arg2: memref<1x80xf32, #tpu.memory_space<vmem>>, %arg3: memref<16x168xf32, #tpu.memory_space<vmem>>) attributes {dimension_semantics = [#tpu.dimension_semantics<parallel>], iteration_bounds = array<i64: 1>, scalar_prefetch = 0 : i64, scratch_operands = 0 : i64, tpu.core_type = #tpu.core_type<tc>, window_params = [{transform_indices = @transform_0, window_bounds = array<i64: 16, 8>}, {pipeline_mode = #tpu.pipeline_mode<synchronous>, transform_indices = @transform_1, window_bounds = array<i64: 1, 80>}, {transform_indices = @transform_2, window_bounds = array<i64: 16, 168>}]} {
    %c0 = arith.constant 0 : index
    %c0_0 = arith.constant 0 : index
    %0 = vector.load %arg1[%c0, %c0_0] : memref<16x8xf32, #tpu.memory_space<vmem>>, vector<16x8xf32>
    %1 = vector.extract_strided_slice %0 {offsets = [0, 0], sizes = [16, 1], strides = [1, 1]} : vector<16x8xf32> to vector<16x1xf32>
    %2 = vector.shape_cast %1 : vector<16x1xf32> to vector<16x1xf32>
    %3 = vector.broadcast %2 : vector<16x1xf32> to vector<16x10xf32>
    %4 = vector.extract_strided_slice %0 {offsets = [0, 1], sizes = [16, 1], strides = [1, 1]} : vector<16x8xf32> to vector<16x1xf32>
    %5 = vector.shape_cast %4 : vector<16x1xf32> to vector<16x1xf32>
    %6 = vector.broadcast %5 : vector<16x1xf32> to vector<16x10xf32>
    %7 = vector.extract_strided_slice %0 {offsets = [0, 2], sizes = [16, 1], strides = [1, 1]} : vector<16x8xf32> to vector<16x1xf32>
    %8 = vector.shape_cast %7 : vector<16x1xf32> to vector<16x1xf32>
    %9 = vector.broadcast %8 : vector<16x1xf32> to vector<16x10xf32>
    %10 = vector.extract_strided_slice %0 {offsets = [0, 3], sizes = [16, 1], strides = [1, 1]} : vector<16x8xf32> to vector<16x1xf32>
    %11 = vector.shape_cast %10 : vector<16x1xf32> to vector<16x1xf32>
    %12 = vector.broadcast %11 : vector<16x1xf32> to vector<16x10xf32>
    %13 = vector.extract_strided_slice %0 {offsets = [0, 4], sizes = [16, 1], strides = [1, 1]} : vector<16x8xf32> to vector<16x1xf32>
    %14 = vector.shape_cast %13 : vector<16x1xf32> to vector<16x1xf32>
    %15 = vector.broadcast %14 : vector<16x1xf32> to vector<16x10xf32>
    %16 = vector.extract_strided_slice %0 {offsets = [0, 5], sizes = [16, 1], strides = [1, 1]} : vector<16x8xf32> to vector<16x1xf32>
    %17 = vector.shape_cast %16 : vector<16x1xf32> to vector<16x1xf32>
    %18 = vector.broadcast %17 : vector<16x1xf32> to vector<16x10xf32>
    %19 = vector.extract_strided_slice %0 {offsets = [0, 6], sizes = [16, 1], strides = [1, 1]} : vector<16x8xf32> to vector<16x1xf32>
    %20 = vector.shape_cast %19 : vector<16x1xf32> to vector<16x1xf32>
    %21 = vector.broadcast %20 : vector<16x1xf32> to vector<16x10xf32>
    %22 = vector.extract_strided_slice %0 {offsets = [0, 7], sizes = [16, 1], strides = [1, 1]} : vector<16x8xf32> to vector<16x1xf32>
    %23 = vector.shape_cast %22 : vector<16x1xf32> to vector<16x1xf32>
    %24 = vector.broadcast %23 : vector<16x1xf32> to vector<16x10xf32>
    %25 = tpu.concatenate %3, %6, %9, %12, %15, %18, %21, %24 in 1 : vector<16x10xf32>, vector<16x10xf32>, vector<16x10xf32>, vector<16x10xf32>, vector<16x10xf32>, vector<16x10xf32>, vector<16x10xf32>, vector<16x10xf32> -> vector<16x80xf32>
    %c0_1 = arith.constant 0 : index
    %c0_2 = arith.constant 0 : index
    %26 = vector.load %arg2[%c0_1, %c0_2] : memref<1x80xf32, #tpu.memory_space<vmem>>, vector<1x80xf32>
    %27 = vector.broadcast %26 : vector<1x80xf32> to vector<16x80xf32>
    %28 = arith.mulf %25, %27 : vector<16x80xf32>
    %29 = math.sin %28 : vector<16x80xf32>
    %cst = arith.constant 1.57079637 : f32
    %30 = vector.broadcast %cst : f32 to vector<16x80xf32>
    %31 = arith.addf %28, %30 : vector<16x80xf32>
    %32 = math.sin %31 : vector<16x80xf32>
    %33 = tpu.concatenate %29, %32, %0 in 1 : vector<16x80xf32>, vector<16x80xf32>, vector<16x8xf32> -> vector<16x168xf32>
    %c0_3 = arith.constant 0 : index
    %c0_4 = arith.constant 0 : index
    %34 = vector.load %arg3[%c0_3, %c0_4] : memref<16x168xf32, #tpu.memory_space<vmem>>, vector<16x168xf32>
    tpu.vector_store %arg3[%c0_3, %c0_4], %33 {strides = array<i32>} : memref<16x168xf32, #tpu.memory_space<vmem>>, vector<16x168xf32>,
    return
  }
  func.func @transform_0(%arg0: i32) -> (i32, i32) {
    %c0_i32 = arith.constant 0 : i32
    %c0_i32_0 = arith.constant 0 : i32
    return %arg0, %c0_i32 : i32, i32
  }
  func.func @transform_1(%arg0: i32) -> (i32, i32) {
    %c0_i32 = arith.constant 0 : i32
    %c0_i32_0 = arith.constant 0 : i32
    %c0_i32_1 = arith.constant 0 : i32
    return %c0_i32, %c0_i32_0 : i32, i32
  }
  func.func @transform_2(%arg0: i32) -> (i32, i32) {
    %c0_i32 = arith.constant 0 : i32
    %c0_i32_0 = arith.constant 0 : i32
    return %arg0, %c0_i32 : i32, i32
  }
}

</mosaic_0001>

<llo_original>
// kernel: tpu_custom_call.1
$region0: #{tpu_custom_call.1}
  #allocation0 [shape = 'u32[]', space=smem, size = 0x4, offset = 0x4, fixed_abs, tag = 'smem constant byte address 0x4 - core index']
  #allocation1 [shape = 'u32[72,128]{1,0:T(1,128)}', space=vmem, size = 0x9000, scoped, tag = 'internal scratch']
  %s0 = inlined_call_operand.vmem [shape: f32[16,8], index: 0, kind: input, shape index: {}]
  %s1 = inlined_call_operand.vmem [shape: f32[1,80], index: 1, kind: input, shape index: {}]
  %s2 = inlined_call_operand.hbm [shape: f32[16,168], index: 2, kind: output, shape index: {}]
  %s3 = sld [smem:[#allocation0]]
  $region18: #{tpu_custom_call.1} parent=0
    _
  %s5 = ssub.s32 1, %s3
  %s6 = scalar_select 0, %s5, %s3
  $region1: #{tpu_custom_call.1} parent=0
    #allocation2 [shape = 'u8[16384]{0}', space=vmem, size = 0x4000, scoped, tag = 'output window, operand 0, single buffered']
    #allocation3 [shape = 's32[1]{0}', space=sflag, size = 0x4, scoped, tag = 'scoped memory for tpu_custom_call.1']
    %7 = vsyncpa [#allocation3], 0
    // Predicated region
    $region2: #{tpu_custom_call.1} parent=1 // pred_check
      _
    $region3: #{tpu_custom_call.1} parent=1 // pred_check_branch
      %9 = sbr.rel (0) target = $region5
    $region4: #{tpu_custom_call.1} parent=1 // pred_region
      _
    $region5: #{tpu_custom_call.1} parent=1 // pred_fallthru
      _
    // Predicated region
    $region6: #{tpu_custom_call.1} parent=1 // pred_check
      _
    $region7: #{tpu_custom_call.1} parent=1 // pred_check_branch
      %11 = sbr.rel (0) target = $region9
    $region8: #{tpu_custom_call.1} parent=1 // pred_region
      _
    $region9: #{tpu_custom_call.1} parent=1 // pred_fallthru
      _
    %v12 = vld [vmem:[%s0] sm:$0xff]
    %v13 = vld [vmem:[%s0 + $0x8] sm:$0xff]
    %15 = vset.pattern.permute.xlu0 0
    %16 = vperm.xlu0 %15, %v12
    %v17 = vpop.permute.xlu0 %16
    %20 = vset.pattern.permute.xlu0 0
    %21 = vperm.xlu0 %20, %v13
    %v22 = vpop.permute.xlu0 %21
    %24 = vset.pattern.permute.xlu0 1
    %25 = vperm.xlu0 %24, %v12
    %v26 = vpop.permute.xlu0 %25
    %28 = vset.pattern.permute.xlu0 1
    %29 = vperm.xlu0 %28, %v13
    %v30 = vpop.permute.xlu0 %29
    %32 = vset.pattern.permute.xlu0 2
    %33 = vperm.xlu0 %32, %v12
    %v34 = vpop.permute.xlu0 %33
    %36 = vset.pattern.permute.xlu0 2
    %37 = vperm.xlu0 %36, %v13
    %v38 = vpop.permute.xlu0 %37
    %40 = vset.pattern.permute.xlu0 3
    %41 = vperm.xlu0 %40, %v12
    %v42 = vpop.permute.xlu0 %41
    %44 = vset.pattern.permute.xlu0 3
    %45 = vperm.xlu0 %44, %v13
    %v46 = vpop.permute.xlu0 %45
    %48 = vset.pattern.permute.xlu0 4
    %49 = vperm.xlu0 %48, %v12
    %v50 = vpop.permute.xlu0 %49
    %52 = vset.pattern.permute.xlu0 4
    %53 = vperm.xlu0 %52, %v13
    %v54 = vpop.permute.xlu0 %53
    %56 = vset.pattern.permute.xlu0 5
    %57 = vperm.xlu0 %56, %v12
    %v58 = vpop.permute.xlu0 %57
    %60 = vset.pattern.permute.xlu0 5
    %61 = vperm.xlu0 %60, %v13
    %v62 = vpop.permute.xlu0 %61
    %64 = vset.pattern.permute.xlu0 6
    %65 = vperm.xlu0 %64, %v12
    %v66 = vpop.permute.xlu0 %65
    %68 = vset.pattern.permute.xlu0 6
    %69 = vperm.xlu0 %68, %v13
    %v70 = vpop.permute.xlu0 %69
    %72 = vset.pattern.permute.xlu0 7
    %73 = vperm.xlu0 %72, %v12
    %v74 = vpop.permute.xlu0 %73
    %76 = vset.pattern.permute.xlu0 7
    %77 = vperm.xlu0 %76, %v13
    %v78 = vpop.permute.xlu0 %77
    %vm80 = vcmask 80896
    %v81 = vsel %vm80, %v17, %v26
    %v82 = vsel %vm80, %v22, %v30
    %vm83 = vcmask 162816
    %v84 = vsel %vm83, %v81, %v34
    %v85 = vsel %vm83, %v82, %v38
    %vm86 = vcmask 244736
    %v87 = vsel %vm86, %v84, %v42
    %v88 = vsel %vm86, %v85, %v46
    %vm89 = vcmask 326656
    %v90 = vsel %vm89, %v87, %v50
    %v91 = vsel %vm89, %v88, %v54
    %vm92 = vcmask 408576
    %v93 = vsel %vm92, %v90, %v58
    %v94 = vsel %vm92, %v91, %v62
    %vm95 = vcmask 490496
    %v96 = vsel %vm95, %v93, %v66
    %v97 = vsel %vm95, %v94, %v70
    %vm98 = vcmask 572416
    %v99 = vsel %vm98, %v96, %v74
    %v100 = vsel %vm98, %v97, %v78
    %v101 = vld [vmem:[%s1] sm:$0x1]
    %v103 = vperm.slane %v101, 0
    %v105 = vmul.f32 %v99, %v103
    %v106 = vmul.f32 %v100, %v103
    %v107 = vand.u32 2147483647, %v105
    %vm108 = vcmp.le.f32.partialorder %v107, 0.7853982
    %vm109 = vcmp.lt.s32.totalorder %v105, 0
    %v110 = vand.u32 %v105, 2139095040
    %v111 = vshrl.u32 %v110, 23
    %v112 = vsub.s32 %v111, 127
    %v113 = vand.u32 2147483647, %v105
    %v114 = vand.u32 %v113, 8388607
    %v115 = vor.u32 %v114, 8388608
    %v116 = vsub.s32 0, %v115
    %v117 = vadd.s32 %v112, 1
    %vm118 = vcmp.gt.s32.totalorder %v117, 0
    %v119 = vsel %vm118, %v117, 0
    %v120 = vshrl.u32 %v119, 5
    %v121 = vand.u32 %v119, 31
    %v122 = vsub.s32 32, %v121
    %v123 = vshrl.u32 683565275, %v122
    %v124 = vshll.u32 683565275, %v121
    %v125 = vshrl.u32 2475754826, %v122
    %v126 = vor.u32 %v124, %v125
    %v127 = vshll.u32 2475754826, %v121
    %v128 = vshrl.u32 2131351028, %v122
    %v129 = vor.u32 %v127, %v128
    %v130 = vshll.u32 2131351028, %v121
    %v131 = vshrl.u32 2102212464, %v122
    %v132 = vor.u32 %v130, %v131
    %v133 = vshll.u32 2102212464, %v121
    %v134 = vshrl.u32 920167782, %v122
    %v135 = vor.u32 %v133, %v134
    %v136 = vshll.u32 920167782, %v121
    %v137 = vshrl.u32 1326507024, %v122
    %v138 = vor.u32 %v136, %v137
    %vm139 = vcmp.lt.s32.totalorder %v120, 1
    %vm140 = vcmp.lt.s32.totalorder %v120, 2
    %vm141 = vcmp.lt.s32.totalorder %v120, 3
    %vm142 = vcmp.lt.s32.totalorder %v120, 4
    %v143 = vsel %vm139, %v123, %v126
    %v144 = vsel %vm142, %v132, 2102212464
    %v145 = vsel %vm141, %v129, %v144
    %v146 = vsel %vm140, %v143, %v145
    %v147 = vsel %vm139, %v126, %v129
    %v148 = vsel %vm142, %v135, 920167782
    %v149 = vsel %vm141, %v132, %v148
    %v150 = vsel %vm140, %v147, %v149
    %v151 = vsel %vm139, %v129, %v132
    %v152 = vsel %vm142, %v138, 1326507024
    %v153 = vsel %vm141, %v135, %v152
    %v154 = vsel %vm140, %v151, %v153
    %v155 = vshll.u32 %v115, 8
    %v156 = vand.u32 %v155, 65535
    %v157 = vshrl.u32 %v155, 16
    %v158 = vand.u32 %v154, 65535
    %v159 = vshrl.u32 %v154, 16
    %v160 = vmul.u32 %v156, %v158
    %v161 = vmul.u32 %v156, %v159
    %v162 = vmul.u32 %v157, %v158
    %v163 = vmul.u32 %v157, %v159
    %v164 = vshll.u32 %v161, 16
    %v165 = vshrl.u32 %v161, 16
    %v166 = vshll.u32 %v162, 16
    %v167 = vshrl.u32 %v162, 16
    %vm168 = vc.u32 %v160, %v164
    %v169 = vsel %vm168, 1, 0
    %v170 = vadd.s32 %v160, %v164
    %v171 = vadd.s32 %v163, %v169
    %vm172 = vc.u32 %v170, %v166
    %v173 = vsel %vm172, 1, 0
    %v174 = vadd.s32 %v170, %v166
    %v175 = vadd.s32 %v171, %v173
    %v176 = vadd.s32 %v175, %v165
    %v177 = vadd.s32 %v176, %v167
    %v178 = vand.u32 %v155, 65535
    %v179 = vshrl.u32 %v155, 16
    %v180 = vand.u32 %v150, 65535
    %v181 = vshrl.u32 %v150, 16
    %v182 = vmul.u32 %v178, %v180
    %v183 = vmul.u32 %v178, %v181
    %v184 = vmul.u32 %v179, %v180
    %v185 = vmul.u32 %v179, %v181
    %v186 = vshll.u32 %v183, 16
    %v187 = vshrl.u32 %v183, 16
    %v188 = vshll.u32 %v184, 16
    %v189 = vshrl.u32 %v184, 16
    %vm190 = vc.u32 %v182, %v186
    %v191 = vsel %vm190, 1, 0
    %v192 = vadd.s32 %v182, %v186
    %v193 = vadd.s32 %v185, %v191
    %vm194 = vc.u32 %v192, %v188
    %v195 = vsel %vm194, 1, 0
    %v196 = vadd.s32 %v192, %v188
    %v197 = vadd.s32 %v193, %v195
    %v198 = vadd.s32 %v197, %v187
    %v199 = vadd.s32 %v198, %v189
    %v200 = vmul.u32 %v155, %v146
    %v201 = vadd.s32 %v177, %v196
    %vm202 = vc.u32 %v177, %v196
    %v203 = vadd.s32 %v199, 1
    %v204 = vsel %vm202, %v203, %v199
    %v205 = vadd.s32 %v200, %v204
    %v206 = vadd.s32 %v205, 536870912
    %v207 = vshrl.u32 %v206, 30
    %v208 = vshll.u32 %v207, 30
    %v209 = vsub.s32 %v205, %v208
    %vm210 = vcmp.lt.s32.totalorder %v209, 0
    %v211 = vsub.s32 0, %v209
    %v212 = vsel %vm210, %v211, %v209
    %v213 = vclz %v212
    %v214 = vsub.s32 %v213, 2
    %vm215 = vcmp.gt.s32.totalorder 0, %v214
    %v216 = vsel %vm215, 0, %v214
    %v217 = vsub.s32 32, %v216
    %v218 = vshll.u32 %v209, %v216
    %v219 = vshrl.u32 %v201, %v217
    %v220 = vor.u32 %v218, %v219
    %v221 = vsub.s32 4294967266, %v216
    %v222 = vadd.s32 %v221, 127
    %v223 = vshll.u32 %v222, 23
    %v224 = vor.u32 4788187, %v223
    %v225 = vand.u32 2147483647, %v224
    %v227 = vcvt.s32.f32 %v220
    %v228 = vmul.f32 %v227, %v225
    %v229 = vxor.u32 %v228, 2147483648
    %v230 = vsel %vm109, %v229, %v228
    %v231 = vsub.s32 4, %v207
    %v232 = vsel %vm109, %v231, %v207
    %v233 = vsel %vm108, %v105, %v230
    %v234 = vsel %vm108, 0, %v232
    %v235 = vmul.f32 %v233, %v233
    %v236 = vmul.f32 %v235, -0.001358992
    %v237 = vadd.f32 %v236, 0.041655596
    %v238 = vmul.f32 %v235, %v237
    %v239 = vadd.f32 %v238, -0.4999988
    %v240 = vmul.f32 %v235, %v239
    %v241 = vadd.f32 1.0, %v240
    %v242 = vmul.f32 %v233, %v233
    %v243 = vmul.f32 %v242, -0.00019511016
    %v244 = vadd.f32 %v243, 0.008332121
    %v245 = vmul.f32 %v242, %v244
    %v246 = vadd.f32 %v245, -0.16666654
    %v247 = vmul.f32 %v242, %v246
    %v248 = vadd.f32 %v247, 1.0
    %v249 = vmul.f32 %v248, %v233
    %vm250 = vweird.f32 %v105
    %v251 = vadd.s32 %v234, 3
    %v252 = vand.u32 %v251, 3
    %vm253 = vcmp.lt.s32.totalorder %v252, 2
    %vm254 = vcmp.eq.s32.totalorder %v252, 0
    %v255 = vxor.u32 %v249, 2147483648
    %v256 = vsel %vm254, %v241, %v255
    %vm257 = vcmp.eq.s32.totalorder %v252, 2
    %v258 = vxor.u32 %v241, 2147483648
    %v259 = vsel %vm257, %v258, %v249
    %v260 = vsel %vm253, %v256, %v259
    %v261 = vsel %vm250, nan, %v260
    %v262 = vand.u32 2147483647, %v106
    %vm263 = vcmp.le.f32.partialorder %v262, 0.7853982
    %vm264 = vcmp.lt.s32.totalorder %v106, 0
    %v265 = vand.u32 %v106, 2139095040
    %v266 = vshrl.u32 %v265, 23
    %v267 = vsub.s32 %v266, 127
    %v268 = vand.u32 2147483647, %v106
    %v269 = vand.u32 %v268, 8388607
    %v270 = vor.u32 %v269, 8388608
    %v271 = vsub.s32 0, %v270
    %v272 = vadd.s32 %v267, 1
    %vm273 = vcmp.gt.s32.totalorder %v272, 0
    %v274 = vsel %vm273, %v272, 0
    %v275 = vshrl.u32 %v274, 5
    %v276 = vand.u32 %v274, 31
    %v277 = vsub.s32 32, %v276
    %v278 = vshrl.u32 683565275, %v277
    %v279 = vshll.u32 683565275, %v276
    %v280 = vshrl.u32 2475754826, %v277
    %v281 = vor.u32 %v279, %v280
    %v282 = vshll.u32 2475754826, %v276
    %v283 = vshrl.u32 2131351028, %v277
    %v284 = vor.u32 %v282, %v283
    %v285 = vshll.u32 2131351028, %v276
    %v286 = vshrl.u32 2102212464, %v277
    %v287 = vor.u32 %v285, %v286
    %v288 = vshll.u32 2102212464, %v276
    %v289 = vshrl.u32 920167782, %v277
    %v290 = vor.u32 %v288, %v289
    %v291 = vshll.u32 920167782, %v276
    %v292 = vshrl.u32 1326507024, %v277
    %v293 = vor.u32 %v291, %v292
    %vm294 = vcmp.lt.s32.totalorder %v275, 1
    %vm295 = vcmp.lt.s32.totalorder %v275, 2
    %vm296 = vcmp.lt.s32.totalorder %v275, 3
    %vm297 = vcmp.lt.s32.totalorder %v275, 4
    %v298 = vsel %vm294, %v278, %v281
    %v299 = vsel %vm297, %v287, 2102212464
    %v300 = vsel %vm296, %v284, %v299
    %v301 = vsel %vm295, %v298, %v300
    %v302 = vsel %vm294, %v281, %v284
    %v303 = vsel %vm297, %v290, 920167782
    %v304 = vsel %vm296, %v287, %v303
    %v305 = vsel %vm295, %v302, %v304
    %v306 = vsel %vm294, %v284, %v287
    %v307 = vsel %vm297, %v293, 1326507024
    %v308 = vsel %vm296, %v290, %v307
    %v309 = vsel %vm295, %v306, %v308
    %v310 = vshll.u32 %v270, 8
    %v311 = vand.u32 %v310, 65535
    %v312 = vshrl.u32 %v310, 16
    %v313 = vand.u32 %v309, 65535
    %v314 = vshrl.u32 %v309, 16
    %v315 = vmul.u32 %v311, %v313
    %v316 = vmul.u32 %v311, %v314
    %v317 = vmul.u32 %v312, %v313
    %v318 = vmul.u32 %v312, %v314
    %v319 = vshll.u32 %v316, 16
    %v320 = vshrl.u32 %v316, 16
    %v321 = vshll.u32 %v317, 16
    %v322 = vshrl.u32 %v317, 16
    %vm323 = vc.u32 %v315, %v319
    %v324 = vsel %vm323, 1, 0
    %v325 = vadd.s32 %v315, %v319
    %v326 = vadd.s32 %v318, %v324
    %vm327 = vc.u32 %v325, %v321
    %v328 = vsel %vm327, 1, 0
    %v329 = vadd.s32 %v325, %v321
    %v330 = vadd.s32 %v326, %v328
    %v331 = vadd.s32 %v330, %v320
    %v332 = vadd.s32 %v331, %v322
    %v333 = vand.u32 %v310, 65535
    %v334 = vshrl.u32 %v310, 16
    %v335 = vand.u32 %v305, 65535
    %v336 = vshrl.u32 %v305, 16
    %v337 = vmul.u32 %v333, %v335
    %v338 = vmul.u32 %v333, %v336
    %v339 = vmul.u32 %v334, %v335
    %v340 = vmul.u32 %v334, %v336
    %v341 = vshll.u32 %v338, 16
    %v342 = vshrl.u32 %v338, 16
    %v343 = vshll.u32 %v339, 16
    %v344 = vshrl.u32 %v339, 16
    %vm345 = vc.u32 %v337, %v341
    %v346 = vsel %vm345, 1, 0
    %v347 = vadd.s32 %v337, %v341
    %v348 = vadd.s32 %v340, %v346
    %vm349 = vc.u32 %v347, %v343
    %v350 = vsel %vm349, 1, 0
    %v351 = vadd.s32 %v347, %v343
    %v352 = vadd.s32 %v348, %v350
    %v353 = vadd.s32 %v352, %v342
    %v354 = vadd.s32 %v353, %v344
    %v355 = vmul.u32 %v310, %v301
    %v356 = vadd.s32 %v332, %v351
    %vm357 = vc.u32 %v332, %v351
    %v358 = vadd.s32 %v354, 1
    %v359 = vsel %vm357, %v358, %v354
    %v360 = vadd.s32 %v355, %v359
    %v361 = vadd.s32 %v360, 536870912
    %v362 = vshrl.u32 %v361, 30
    %v363 = vshll.u32 %v362, 30
    %v364 = vsub.s32 %v360, %v363
    %vm365 = vcmp.lt.s32.totalorder %v364, 0
    %v366 = vsub.s32 0, %v364
    %v367 = vsel %vm365, %v366, %v364
    %v368 = vclz %v367
    %v369 = vsub.s32 %v368, 2
    %vm370 = vcmp.gt.s32.totalorder 0, %v369
    %v371 = vsel %vm370, 0, %v369
    %v372 = vsub.s32 32, %v371
    %v373 = vshll.u32 %v364, %v371
    %v374 = vshrl.u32 %v356, %v372
    %v375 = vor.u32 %v373, %v374
    %v376 = vsub.s32 4294967266, %v371
    %v377 = vadd.s32 %v376, 127
    %v378 = vshll.u32 %v377, 23
    %v379 = vor.u32 4788187, %v378
    %v380 = vand.u32 2147483647, %v379
    %v382 = vcvt.s32.f32 %v375
    %v383 = vmul.f32 %v382, %v380
    %v384 = vxor.u32 %v383, 2147483648
    %v385 = vsel %vm264, %v384, %v383
    %v386 = vsub.s32 4, %v362
    %v387 = vsel %vm264, %v386, %v362
    %v388 = vsel %vm263, %v106, %v385
    %v389 = vsel %vm263, 0, %v387
    %v390 = vmul.f32 %v388, %v388
    %v391 = vmul.f32 %v390, -0.001358992
    %v392 = vadd.f32 %v391, 0.041655596
    %v393 = vmul.f32 %v390, %v392
    %v394 = vadd.f32 %v393, -0.4999988
    %v395 = vmul.f32 %v390, %v394
    %v396 = vadd.f32 1.0, %v395
    %v397 = vmul.f32 %v388, %v388
    %v398 = vmul.f32 %v397, -0.00019511016
    %v399 = vadd.f32 %v398, 0.008332121
    %v400 = vmul.f32 %v397, %v399
    %v401 = vadd.f32 %v400, -0.16666654
    %v402 = vmul.f32 %v397, %v401
    %v403 = vadd.f32 %v402, 1.0
    %v404 = vmul.f32 %v403, %v388
    %vm405 = vweird.f32 %v106
    %v406 = vadd.s32 %v389, 3
    %v407 = vand.u32 %v406, 3
    %vm408 = vcmp.lt.s32.totalorder %v407, 2
    %vm409 = vcmp.eq.s32.totalorder %v407, 0
    %v410 = vxor.u32 %v404, 2147483648
    %v411 = vsel %vm409, %v396, %v410
    %vm412 = vcmp.eq.s32.totalorder %v407, 2
    %v413 = vxor.u32 %v396, 2147483648
    %v414 = vsel %vm412, %v413, %v404
    %v415 = vsel %vm408, %v411, %v414
    %v416 = vsel %vm405, nan, %v415
    %v417 = vadd.f32 %v105, 1.5707964
    %v418 = vadd.f32 %v106, 1.5707964
    %v419 = vand.u32 2147483647, %v417
    %vm420 = vcmp.le.f32.partialorder %v419, 0.7853982
    %vm421 = vcmp.lt.s32.totalorder %v417, 0
    %v422 = vand.u32 %v417, 2139095040
    %v423 = vshrl.u32 %v422, 23
    %v424 = vsub.s32 %v423, 127
    %v425 = vand.u32 2147483647, %v417
    %v426 = vand.u32 %v425, 8388607
    %v427 = vor.u32 %v426, 8388608
    %v428 = vsub.s32 0, %v427
    %v429 = vadd.s32 %v424, 1
    %vm430 = vcmp.gt.s32.totalorder %v429, 0
    %v431 = vsel %vm430, %v429, 0
    %v432 = vshrl.u32 %v431, 5
    %v433 = vand.u32 %v431, 31
    %v434 = vsub.s32 32, %v433
    %v435 = vshrl.u32 683565275, %v434
    %v436 = vshll.u32 683565275, %v433
    %v437 = vshrl.u32 2475754826, %v434
    %v438 = vor.u32 %v436, %v437
    %v439 = vshll.u32 2475754826, %v433
    %v440 = vshrl.u32 2131351028, %v434
    %v441 = vor.u32 %v439, %v440
    %v442 = vshll.u32 2131351028, %v433
    %v443 = vshrl.u32 2102212464, %v434
    %v444 = vor.u32 %v442, %v443
    %v445 = vshll.u32 2102212464, %v433
    %v446 = vshrl.u32 920167782, %v434
    %v447 = vor.u32 %v445, %v446
    %v448 = vshll.u32 920167782, %v433
    %v449 = vshrl.u32 1326507024, %v434
    %v450 = vor.u32 %v448, %v449
    %vm451 = vcmp.lt.s32.totalorder %v432, 1
    %vm452 = vcmp.lt.s32.totalorder %v432, 2
    %vm453 = vcmp.lt.s32.totalorder %v432, 3
    %vm454 = vcmp.lt.s32.totalorder %v432, 4
    %v455 = vsel %vm451, %v435, %v438
    %v456 = vsel %vm454, %v444, 2102212464
    %v457 = vsel %vm453, %v441, %v456
    %v458 = vsel %vm452, %v455, %v457
    %v459 = vsel %vm451, %v438, %v441
    %v460 = vsel %vm454, %v447, 920167782
    %v461 = vsel %vm453, %v444, %v460
    %v462 = vsel %vm452, %v459, %v461
    %v463 = vsel %vm451, %v441, %v444
    %v464 = vsel %vm454, %v450, 1326507024
    %v465 = vsel %vm453, %v447, %v464
    %v466 = vsel %vm452, %v463, %v465
    %v467 = vshll.u32 %v427, 8
    %v468 = vand.u32 %v467, 65535
    %v469 = vshrl.u32 %v467, 16
    %v470 = vand.u32 %v466, 65535
    %v471 = vshrl.u32 %v466, 16
    %v472 = vmul.u32 %v468, %v470
    %v473 = vmul.u32 %v468, %v471
    %v474 = vmul.u32 %v469, %v470
    %v475 = vmul.u32 %v469, %v471
    %v476 = vshll.u32 %v473, 16
    %v477 = vshrl.u32 %v473, 16
    %v478 = vshll.u32 %v474, 16
    %v479 = vshrl.u32 %v474, 16
    %vm480 = vc.u32 %v472, %v476
    %v481 = vsel %vm480, 1, 0
    %v482 = vadd.s32 %v472, %v476
    %v483 = vadd.s32 %v475, %v481
    %vm484 = vc.u32 %v482, %v478
    %v485 = vsel %vm484, 1, 0
    %v486 = vadd.s32 %v482, %v478
    %v487 = vadd.s32 %v483, %v485
    %v488 = vadd.s32 %v487, %v477
    %v489 = vadd.s32 %v488, %v479
    %v490 = vand.u32 %v467, 65535
    %v491 = vshrl.u32 %v467, 16
    %v492 = vand.u32 %v462, 65535
    %v493 = vshrl.u32 %v462, 16
    %v494 = vmul.u32 %v490, %v492
    %v495 = vmul.u32 %v490, %v493
    %v496 = vmul.u32 %v491, %v492
    %v497 = vmul.u32 %v491, %v493
    %v498 = vshll.u32 %v495, 16
    %v499 = vshrl.u32 %v495, 16
    %v500 = vshll.u32 %v496, 16
    %v501 = vshrl.u32 %v496, 16
    %vm502 = vc.u32 %v494, %v498
    %v503 = vsel %vm502, 1, 0
    %v504 = vadd.s32 %v494, %v498
    %v505 = vadd.s32 %v497, %v503
    %vm506 = vc.u32 %v504, %v500
    %v507 = vsel %vm506, 1, 0
    %v508 = vadd.s32 %v504, %v500
    %v509 = vadd.s32 %v505, %v507
    %v510 = vadd.s32 %v509, %v499
    %v511 = vadd.s32 %v510, %v501
    %v512 = vmul.u32 %v467, %v458
    %v513 = vadd.s32 %v489, %v508
    %vm514 = vc.u32 %v489, %v508
    %v515 = vadd.s32 %v511, 1
    %v516 = vsel %vm514, %v515, %v511
    %v517 = vadd.s32 %v512, %v516
    %v518 = vadd.s32 %v517, 536870912
    %v519 = vshrl.u32 %v518, 30
    %v520 = vshll.u32 %v519, 30
    %v521 = vsub.s32 %v517, %v520
    %vm522 = vcmp.lt.s32.totalorder %v521, 0
    %v523 = vsub.s32 0, %v521
    %v524 = vsel %vm522, %v523, %v521
    %v525 = vclz %v524
    %v526 = vsub.s32 %v525, 2
    %vm527 = vcmp.gt.s32.totalorder 0, %v526
    %v528 = vsel %vm527, 0, %v526
    %v529 = vsub.s32 32, %v528
    %v530 = vshll.u32 %v521, %v528
    %v531 = vshrl.u32 %v513, %v529
    %v532 = vor.u32 %v530, %v531
    %v533 = vsub.s32 4294967266, %v528
    %v534 = vadd.s32 %v533, 127
    %v535 = vshll.u32 %v534, 23
    %v536 = vor.u32 4788187, %v535
    %v537 = vand.u32 2147483647, %v536
    %v539 = vcvt.s32.f32 %v532
    %v540 = vmul.f32 %v539, %v537
    %v541 = vxor.u32 %v540, 2147483648
    %v542 = vsel %vm421, %v541, %v540
    %v543 = vsub.s32 4, %v519
    %v544 = vsel %vm421, %v543, %v519
    %v545 = vsel %vm420, %v417, %v542
    %v546 = vsel %vm420, 0, %v544
    %v547 = vmul.f32 %v545, %v545
    %v548 = vmul.f32 %v547, -0.001358992
    %v549 = vadd.f32 %v548, 0.041655596
    %v550 = vmul.f32 %v547, %v549
    %v551 = vadd.f32 %v550, -0.4999988
    %v552 = vmul.f32 %v547, %v551
    %v553 = vadd.f32 1.0, %v552
    %v554 = vmul.f32 %v545, %v545
    %v555 = vmul.f32 %v554, -0.00019511016
    %v556 = vadd.f32 %v555, 0.008332121
    %v557 = vmul.f32 %v554, %v556
    %v558 = vadd.f32 %v557, -0.16666654
    %v559 = vmul.f32 %v554, %v558
    %v560 = vadd.f32 %v559, 1.0
    %v561 = vmul.f32 %v560, %v545
    %vm562 = vweird.f32 %v417
    %v563 = vadd.s32 %v546, 3
    %v564 = vand.u32 %v563, 3
    %vm565 = vcmp.lt.s32.totalorder %v564, 2
    %vm566 = vcmp.eq.s32.totalorder %v564, 0
    %v567 = vxor.u32 %v561, 2147483648
    %v568 = vsel %vm566, %v553, %v567
    %vm569 = vcmp.eq.s32.totalorder %v564, 2
    %v570 = vxor.u32 %v553, 2147483648
    %v571 = vsel %vm569, %v570, %v561
    %v572 = vsel %vm565, %v568, %v571
    %v573 = vsel %vm562, nan, %v572
    %v574 = vand.u32 2147483647, %v418
    %vm575 = vcmp.le.f32.partialorder %v574, 0.7853982
    %vm576 = vcmp.lt.s32.totalorder %v418, 0
    %v577 = vand.u32 %v418, 2139095040
    %v578 = vshrl.u32 %v577, 23
    %v579 = vsub.s32 %v578, 127
    %v580 = vand.u32 2147483647, %v418
    %v581 = vand.u32 %v580, 8388607
    %v582 = vor.u32 %v581, 8388608
    %v583 = vsub.s32 0, %v582
    %v584 = vadd.s32 %v579, 1
    %vm585 = vcmp.gt.s32.totalorder %v584, 0
    %v586 = vsel %vm585, %v584, 0
    %v587 = vshrl.u32 %v586, 5
    %v588 = vand.u32 %v586, 31
    %v589 = vsub.s32 32, %v588
    %v590 = vshrl.u32 683565275, %v589
    %v591 = vshll.u32 683565275, %v588
    %v592 = vshrl.u32 2475754826, %v589
    %v593 = vor.u32 %v591, %v592
    %v594 = vshll.u32 2475754826, %v588
    %v595 = vshrl.u32 2131351028, %v589
    %v596 = vor.u32 %v594, %v595
    %v597 = vshll.u32 2131351028, %v588
    %v598 = vshrl.u32 2102212464, %v589
    %v599 = vor.u32 %v597, %v598
    %v600 = vshll.u32 2102212464, %v588
    %v601 = vshrl.u32 920167782, %v589
    %v602 = vor.u32 %v600, %v601
    %v603 = vshll.u32 920167782, %v588
    %v604 = vshrl.u32 1326507024, %v589
    %v605 = vor.u32 %v603, %v604
    %vm606 = vcmp.lt.s32.totalorder %v587, 1
    %vm607 = vcmp.lt.s32.totalorder %v587, 2
    %vm608 = vcmp.lt.s32.totalorder %v587, 3
    %vm609 = vcmp.lt.s32.totalorder %v587, 4
    %v610 = vsel %vm606, %v590, %v593
    %v611 = vsel %vm609, %v599, 2102212464
    %v612 = vsel %vm608, %v596, %v611
    %v613 = vsel %vm607, %v610, %v612
    %v614 = vsel %vm606, %v593, %v596
    %v615 = vsel %vm609, %v602, 920167782
    %v616 = vsel %vm608, %v599, %v615
    %v617 = vsel %vm607, %v614, %v616
    %v618 = vsel %vm606, %v596, %v599
    %v619 = vsel %vm609, %v605, 1326507024
    %v620 = vsel %vm608, %v602, %v619
    %v621 = vsel %vm607, %v618, %v620
    %v622 = vshll.u32 %v582, 8
    %v623 = vand.u32 %v622, 65535
    %v624 = vshrl.u32 %v622, 16
    %v625 = vand.u32 %v621, 65535
    %v626 = vshrl.u32 %v621, 16
    %v627 = vmul.u32 %v623, %v625
    %v628 = vmul.u32 %v623, %v626
    %v629 = vmul.u32 %v624, %v625
    %v630 = vmul.u32 %v624, %v626
    %v631 = vshll.u32 %v628, 16
    %v632 = vshrl.u32 %v628, 16
    %v633 = vshll.u32 %v629, 16
    %v634 = vshrl.u32 %v629, 16
    %vm635 = vc.u32 %v627, %v631
    %v636 = vsel %vm635, 1, 0
    %v637 = vadd.s32 %v627, %v631
    %v638 = vadd.s32 %v630, %v636
    %vm639 = vc.u32 %v637, %v633
    %v640 = vsel %vm639, 1, 0
    %v641 = vadd.s32 %v637, %v633
    %v642 = vadd.s32 %v638, %v640
    %v643 = vadd.s32 %v642, %v632
    %v644 = vadd.s32 %v643, %v634
    %v645 = vand.u32 %v622, 65535
    %v646 = vshrl.u32 %v622, 16
    %v647 = vand.u32 %v617, 65535
    %v648 = vshrl.u32 %v617, 16
    %v649 = vmul.u32 %v645, %v647
    %v650 = vmul.u32 %v645, %v648
    %v651 = vmul.u32 %v646, %v647
    %v652 = vmul.u32 %v646, %v648
    %v653 = vshll.u32 %v650, 16
    %v654 = vshrl.u32 %v650, 16
    %v655 = vshll.u32 %v651, 16
    %v656 = vshrl.u32 %v651, 16
    %vm657 = vc.u32 %v649, %v653
    %v658 = vsel %vm657, 1, 0
    %v659 = vadd.s32 %v649, %v653
    %v660 = vadd.s32 %v652, %v658
    %vm661 = vc.u32 %v659, %v655
    %v662 = vsel %vm661, 1, 0
    %v663 = vadd.s32 %v659, %v655
    %v664 = vadd.s32 %v660, %v662
    %v665 = vadd.s32 %v664, %v654
    %v666 = vadd.s32 %v665, %v656
    %v667 = vmul.u32 %v622, %v613
    %v668 = vadd.s32 %v644, %v663
    %vm669 = vc.u32 %v644, %v663
    %v670 = vadd.s32 %v666, 1
    %v671 = vsel %vm669, %v670, %v666
    %v672 = vadd.s32 %v667, %v671
    %v673 = vadd.s32 %v672, 536870912
    %v674 = vshrl.u32 %v673, 30
    %v675 = vshll.u32 %v674, 30
    %v676 = vsub.s32 %v672, %v675
    %vm677 = vcmp.lt.s32.totalorder %v676, 0
    %v678 = vsub.s32 0, %v676
    %v679 = vsel %vm677, %v678, %v676
    %v680 = vclz %v679
    %v681 = vsub.s32 %v680, 2
    %vm682 = vcmp.gt.s32.totalorder 0, %v681
    %v683 = vsel %vm682, 0, %v681
    %v684 = vsub.s32 32, %v683
    %v685 = vshll.u32 %v676, %v683
    %v686 = vshrl.u32 %v668, %v684
    %v687 = vor.u32 %v685, %v686
    %v688 = vsub.s32 4294967266, %v683
    %v689 = vadd.s32 %v688, 127
    %v690 = vshll.u32 %v689, 23
    %v691 = vor.u32 4788187, %v690
    %v692 = vand.u32 2147483647, %v691
    %v694 = vcvt.s32.f32 %v687
    %v695 = vmul.f32 %v694, %v692
    %v696 = vxor.u32 %v695, 2147483648
    %v697 = vsel %vm576, %v696, %v695
    %v698 = vsub.s32 4, %v674
    %v699 = vsel %vm576, %v698, %v674
    %v700 = vsel %vm575, %v418, %v697
    %v701 = vsel %vm575, 0, %v699
    %v702 = vmul.f32 %v700, %v700
    %v703 = vmul.f32 %v702, -0.001358992
    %v704 = vadd.f32 %v703, 0.041655596
    %v705 = vmul.f32 %v702, %v704
    %v706 = vadd.f32 %v705, -0.4999988
    %v707 = vmul.f32 %v702, %v706
    %v708 = vadd.f32 1.0, %v707
    %v709 = vmul.f32 %v700, %v700
    %v710 = vmul.f32 %v709, -0.00019511016
    %v711 = vadd.f32 %v710, 0.008332121
    %v712 = vmul.f32 %v709, %v711
    %v713 = vadd.f32 %v712, -0.16666654
    %v714 = vmul.f32 %v709, %v713
    %v715 = vadd.f32 %v714, 1.0
    %v716 = vmul.f32 %v715, %v700
    %vm717 = vweird.f32 %v418
    %v718 = vadd.s32 %v701, 3
    %v719 = vand.u32 %v718, 3
    %vm720 = vcmp.lt.s32.totalorder %v719, 2
    %vm721 = vcmp.eq.s32.totalorder %v719, 0
    %v722 = vxor.u32 %v716, 2147483648
    %v723 = vsel %vm721, %v708, %v722
    %vm724 = vcmp.eq.s32.totalorder %v719, 2
    %v725 = vxor.u32 %v708, 2147483648
    %v726 = vsel %vm724, %v725, %v716
    %v727 = vsel %vm720, %v723, %v726
    %v728 = vsel %vm717, nan, %v727
    %731 = vrot.lane.b32.xlu0 %v573, 80
    %v732 = vpop.permute.xlu0 %731
    %733 = vrot.lane.b32.xlu0 %v728, 80
    %v734 = vpop.permute.xlu0 %733
    %737 = vrot.lane.b32.xlu0 %v12, 32
    %v738 = vpop.permute.xlu0 %737
    %739 = vrot.lane.b32.xlu0 %v13, 32
    %v740 = vpop.permute.xlu0 %739
    %vm743 = vcmask 654336
    %v744 = vsel %vm743, %v261, %v732
    %v745 = vsel %vm743, %v416, %v734
    %vm746 = vcmask 261120
    %v747 = vsel %vm746, %v732, %v738
    %v748 = vsel %vm746, %v734, %v740
    %749 = vst [vmem:[#allocation2] sm:$0xff] %v744
    %750 = vst.msk [vmem:[#allocation2 + $0x8] sm:$0xff] %vm89, %v747
    %751 = vst [vmem:[#allocation2 + $0x10] sm:$0xff] %v745
    %752 = vst.msk [vmem:[#allocation2 + $0x18] sm:$0xff] %vm89, %v748
    // Predicated region
    $region10: #{tpu_custom_call.1} parent=1 // pred_check
      _
    $region11: #{tpu_custom_call.1} parent=1 // pred_check_branch
      %754 = sbr.rel (0) target = $region13
    $region12: #{tpu_custom_call.1} parent=1 // pred_region
      %756 = vsyncadd [#allocation3], 0
      %s757 = sshll.u32 [#allocation2], 4
      %s758 = int_to_ptr.vmem [resolvable:$true] %s757
      %s759 = sshll.u32 %s2, 4
      %s760 = int_to_ptr.hbm [resolvable:$true] %s759
      %765 = dma.vmem_to_hbm [thread:$0]  %s758, 512, %s760, [#allocation3], 256, 256, 16
    $region13: #{tpu_custom_call.1} parent=1 // pred_fallthru
      _
    // Predicated region
    $region14: #{tpu_custom_call.1} parent=1 // pred_check
      _
    $region15: #{tpu_custom_call.1} parent=1 // pred_check_branch
      %767 = sbr.rel (0) target = $region17
    $region16: #{tpu_custom_call.1} parent=1 // pred_region
      %769 = dma.done [#allocation3], 512
    $region17: #{tpu_custom_call.1} parent=1 // pred_fallthru
      _
    %770 = vsyncpa [#allocation3], 1

</llo_original>
